<compile_context>
chip_gen: v7x
topology: tpu7x:2x2x1
jax: 0.10.0
libtpu: 0.0.40
codegen_flags: <defaults>
</compile_context>

<pallas_src>
import jax
import jax.numpy as jnp
from jax.experimental import pallas as pl
from jax.experimental.pallas import tpu as pltpu


def _round_up(x, m):
    return ((x + m - 1) // m) * m


def _imu_mlp_kernel(x_ref, wa_ref, ba_ref, wb_ref, bb_ref, ot_ref):
    # Fused MLP tile: 2 MXU matmuls + ReLU; store transposed (classes, batch)
    # so the HBM writeback is lane-dense along batch.
    x = x_ref[...]                                               # (tile, d_in)
    h = jnp.dot(x, wa_ref[...], preferred_element_type=jnp.float32) + ba_ref[...]
    h = jnp.maximum(h, 0.0)                                      # (tile, h_dim)
    o = jnp.dot(h, wb_ref[...], preferred_element_type=jnp.float32) + bb_ref[...]
    # (tile, n_cls_pad) -> (n_cls_pad, tile): tiny transpose on the idle XLU.
    ot_ref[...] = o.T.astype(ot_ref.dtype)


def fold_imu_mlp_params(params):
    """Fold activation-free adjacent linears.  Pure function of the params --
    call ONCE when params are loaded, not per forward call."""
    wa = params["we"] @ params["w1"]                       # (d_in, h_dim)
    ba = params["be"] @ params["w1"] + params["b1"]        # (1, h_dim)
    wb = params["w2"] @ params["wh"]                       # (h_dim, n_cls)
    bb = params["b2"] @ params["wh"] + params["bh"]        # (1, n_cls)
    n_cls = wb.shape[1]
    n_cls_pad = _round_up(max(n_cls, 1), 8)                # sublane-pad classes
    if n_cls_pad != n_cls:
        wb = jnp.pad(wb, ((0, 0), (0, n_cls_pad - n_cls)))
        bb = jnp.pad(bb, ((0, 0), (0, n_cls_pad - n_cls)))
    return dict(wa=wa, ba=ba, wb=wb, bb=bb, n_cls=n_cls)


def imu_mlp_classifier(x, folded, *, tile_b=2048):
    """Forward pass.  x: (B, C, T) float32.  folded: fold_imu_mlp_params(...)."""
    B = x.shape[0]
    x_flat = x.reshape(B, -1)                  # nn.Flatten (row-major, as torch)
    d_in = x_flat.shape[1]
    wa, ba, wb, bb = folded["wa"], folded["ba"], folded["wb"], folded["bb"]
    n_cls = folded["n_cls"]
    h_dim = wa.shape[1]
    n_cls_pad = wb.shape[1]

    # Batch tiling:
    #  * tile is a multiple of 128 -> transposed output block is lane-dense and
    #    the x block is sublane-aligned.
    #  * cdiv grid + Pallas masked edge block handles ragged B (no x pad copy).
    #  * cap at ceil(B/2) so large batches give >= 2 parallel steps (v7x 2 TCs).
    tile = max(128, min(tile_b, _round_up(pl.cdiv(B, 2), 128)))
    grid = (pl.cdiv(B, tile),)

    # Constant index_map -> weights stay resident in VMEM across grid steps.
    const = lambda shape: pl.BlockSpec(shape, lambda i: (0, 0))

    out_t = pl.pallas_call(
        _imu_mlp_kernel,
        out_shape=jax.ShapeDtypeStruct((n_cls_pad, B), jnp.float32),
        grid_spec=pltpu.PrefetchScalarGridSpec(
            num_scalar_prefetch=0,
            grid=grid,
            in_specs=[
                pl.BlockSpec((tile, d_in), lambda i: (i, 0)),      # x tile
                const((d_in, h_dim)), const((1, h_dim)),           # folded lin 1
                const((h_dim, n_cls_pad)), const((1, n_cls_pad)),  # folded lin 2
            ],
            out_specs=pl.BlockSpec((n_cls_pad, tile), lambda i: (0, i)),
        ),
        compiler_params=pltpu.CompilerParams(
            dimension_semantics=("parallel",)),
    )(x_flat, wa, ba, wb, bb)

    # (n_cls_pad, B) -> (B, n_cls): tiny wrapper transpose/slice of the logits.
    return out_t[:n_cls, :].T


def _reference(x, params):
    # Unfolded reference, exactly mirroring the PyTorch module.
    x_flat = x.reshape(x.shape[0], -1)
    e = x_flat @ params["we"] + params["be"]
    h = jnp.maximum(e @ params["w1"] + params["b1"], 0.0)
    z = h @ params["w2"] + params["b2"]
    return z @ params["wh"] + params["bh"]


if __name__ == "__main__":
    # Small shapes consistent with the module: x is (B, channels, time),
    # input_dim = channels * time, hidden_dim = 4 * embed_dim.
    B, C, T = 16, 3, 16           # input_dim = 48
    embed_dim = 32
    hidden_dim = embed_dim * 4    # 128
    num_classes = 5
    input_dim = C * T

    key = jax.random.PRNGKey(0)
    kx, k1, k2, k3, k4, k5, k6, k7, k8 = jax.random.split(key, 9)

    x = jax.random.normal(kx, (B, C, T), dtype=jnp.float32)

    def init_linear(kw, kb, fan_in, fan_out):
        # deterministic, roughly Kaiming-uniform-like scale as in nn.Linear
        bound = 1.0 / jnp.sqrt(jnp.float32(fan_in))
        w = jax.random.uniform(kw, (fan_in, fan_out), jnp.float32, -bound, bound)
        b = jax.random.uniform(kb, (1, fan_out), jnp.float32, -bound, bound)
        return w, b

    we, be = init_linear(k1, k2, input_dim, embed_dim)
    w1, b1 = init_linear(k3, k4, embed_dim, hidden_dim)
    w2, b2 = init_linear(k5, k6, hidden_dim, embed_dim)
    wh, bh = init_linear(k7, k8, embed_dim, num_classes)

    params = dict(we=we, be=be, w1=w1, b1=b1, w2=w2, b2=b2, wh=wh, bh=bh)

    folded = fold_imu_mlp_params(params)   # hoisted: once per param load
    out = imu_mlp_classifier(x, folded)
    out = jax.block_until_ready(out)

    ref = _reference(x, params)
    assert out.shape == (B, num_classes)
    assert jnp.allclose(out, ref, atol=1e-4, rtol=1e-4), "mismatch vs reference"

    print("KERNEL_OK")
</pallas_src>

<mosaic_0001>
module attributes {stable_mosaic.version = 11 : i64} {
  func.func @_imu_mlp_kernel(%arg0: i32, %arg1: memref<128x48xf32, #tpu.memory_space<vmem>>, %arg2: memref<48x128xf32, #tpu.memory_space<vmem>>, %arg3: memref<1x128xf32, #tpu.memory_space<vmem>>, %arg4: memref<128x8xf32, #tpu.memory_space<vmem>>, %arg5: memref<1x8xf32, #tpu.memory_space<vmem>>, %arg6: memref<8x128xf32, #tpu.memory_space<vmem>>) attributes {dimension_semantics = [#tpu.dimension_semantics<parallel>], iteration_bounds = array<i64: 1>, scalar_prefetch = 0 : i64, scratch_operands = 0 : i64, tpu.core_type = #tpu.core_type<tc>, window_params = [{transform_indices = @transform_0, window_bounds = array<i64: 128, 48>}, {pipeline_mode = #tpu.pipeline_mode<synchronous>, transform_indices = @transform_1, window_bounds = array<i64: 48, 128>}, {pipeline_mode = #tpu.pipeline_mode<synchronous>, transform_indices = @transform_2, window_bounds = array<i64: 1, 128>}, {pipeline_mode = #tpu.pipeline_mode<synchronous>, transform_indices = @transform_3, window_bounds = array<i64: 128, 8>}, {pipeline_mode = #tpu.pipeline_mode<synchronous>, transform_indices = @transform_4, window_bounds = array<i64: 1, 8>}, {transform_indices = @transform_5, window_bounds = array<i64: 8, 128>}]} {
    %c0 = arith.constant 0 : index
    %c0_0 = arith.constant 0 : index
    %0 = vector.load %arg1[%c0, %c0_0] : memref<128x48xf32, #tpu.memory_space<vmem>>, vector<128x48xf32>
    %c0_1 = arith.constant 0 : index
    %c0_2 = arith.constant 0 : index
    %1 = vector.load %arg2[%c0_1, %c0_2] : memref<48x128xf32, #tpu.memory_space<vmem>>, vector<48x128xf32>
    %cst = arith.constant dense<0.000000e+00> : vector<128x128xf32>
    %2 = tpu.matmul %0, %1, %cst {dimension_numbers = #tpu.dot_dimension_numbers<[1], [0], [0], [1], [0, 0, 1, 1], [], []>} : vector<128x48xf32>, vector<48x128xf32>, vector<128x128xf32> -> vector<128x128xf32>
    %c0_3 = arith.constant 0 : index
    %c0_4 = arith.constant 0 : index
    %3 = vector.load %arg3[%c0_3, %c0_4] : memref<1x128xf32, #tpu.memory_space<vmem>>, vector<1x128xf32>
    %4 = vector.broadcast %3 : vector<1x128xf32> to vector<128x128xf32>
    %5 = arith.addf %2, %4 : vector<128x128xf32>
    %cst_5 = arith.constant 0.000000e+00 : f32
    %6 = vector.broadcast %cst_5 : f32 to vector<128x128xf32>
    %7 = arith.maximumf %5, %6 : vector<128x128xf32>
    %c0_6 = arith.constant 0 : index
    %c0_7 = arith.constant 0 : index
    %8 = vector.load %arg4[%c0_6, %c0_7] : memref<128x8xf32, #tpu.memory_space<vmem>>, vector<128x8xf32>
    %cst_8 = arith.constant dense<0.000000e+00> : vector<128x8xf32>
    %9 = tpu.matmul %7, %8, %cst_8 {dimension_numbers = #tpu.dot_dimension_numbers<[1], [0], [0], [1], [0, 0, 1, 1], [], []>} : vector<128x128xf32>, vector<128x8xf32>, vector<128x8xf32> -> vector<128x8xf32>
    %c0_9 = arith.constant 0 : index
    %c0_10 = arith.constant 0 : index
    %10 = vector.load %arg5[%c0_9, %c0_10] : memref<1x8xf32, #tpu.memory_space<vmem>>, vector<1x8xf32>
    %11 = vector.broadcast %10 : vector<1x8xf32> to vector<128x8xf32>
    %12 = arith.addf %9, %11 : vector<128x8xf32>
    %13 = tpu.transpose %12, [1, 0] : vector<128x8xf32> -> vector<8x128xf32>
    %c0_11 = arith.constant 0 : index
    %c0_12 = arith.constant 0 : index
    %14 = vector.load %arg6[%c0_11, %c0_12] : memref<8x128xf32, #tpu.memory_space<vmem>>, vector<8x128xf32>
    tpu.vector_store %arg6[%c0_11, %c0_12], %13 {strides = array<i32>} : memref<8x128xf32, #tpu.memory_space<vmem>>, vector<8x128xf32>,
    return
  }
  func.func @transform_0(%arg0: i32) -> (i32, i32) {
    %c0_i32 = arith.constant 0 : i32
    %c0_i32_0 = arith.constant 0 : i32
    return %arg0, %c0_i32 : i32, i32
  }
  func.func @transform_1(%arg0: i32) -> (i32, i32) {
    %c0_i32 = arith.constant 0 : i32
    %c0_i32_0 = arith.constant 0 : i32
    %c0_i32_1 = arith.constant 0 : i32
    return %c0_i32, %c0_i32_0 : i32, i32
  }
  func.func @transform_2(%arg0: i32) -> (i32, i32) {
    %c0_i32 = arith.constant 0 : i32
    %c0_i32_0 = arith.constant 0 : i32
    %c0_i32_1 = arith.constant 0 : i32
    return %c0_i32, %c0_i32_0 : i32, i32
  }
  func.func @transform_3(%arg0: i32) -> (i32, i32) {
    %c0_i32 = arith.constant 0 : i32
    %c0_i32_0 = arith.constant 0 : i32
    %c0_i32_1 = arith.constant 0 : i32
    return %c0_i32, %c0_i32_0 : i32, i32
  }
  func.func @transform_4(%arg0: i32) -> (i32, i32) {
    %c0_i32 = arith.constant 0 : i32
    %c0_i32_0 = arith.constant 0 : i32
    %c0_i32_1 = arith.constant 0 : i32
    return %c0_i32, %c0_i32_0 : i32, i32
  }
  func.func @transform_5(%arg0: i32) -> (i32, i32) {
    %c0_i32 = arith.constant 0 : i32
    %c0_i32_0 = arith.constant 0 : i32
    return %c0_i32, %arg0 : i32, i32
  }
}

</mosaic_0001>

<llo_original>
// kernel: tpu_custom_call.1
$region0: #{tpu_custom_call.1}
  #allocation0 [shape = 'u32[]', space=smem, size = 0x4, offset = 0x4, fixed_abs, tag = 'smem constant byte address 0x4 - core index']
  #allocation1 [shape = 'u32[144,128]{1,0:T(1,128)}', space=vmem, size = 0x12000, scoped, tag = 'internal scratch']
  %s0 = inlined_call_operand.vmem [shape: f32[16,48], index: 0, kind: input, shape index: {}]
  %s1 = inlined_call_operand.vmem [shape: f32[48,128], index: 1, kind: input, shape index: {}]
  %s2 = inlined_call_operand.vmem [shape: f32[1,128], index: 2, kind: input, shape index: {}]
  %s3 = inlined_call_operand.vmem [shape: f32[128,8], index: 3, kind: input, shape index: {}]
  %s4 = inlined_call_operand.vmem [shape: f32[1,8], index: 4, kind: input, shape index: {}]
  %s5 = inlined_call_operand.hbm [shape: f32[8,16], index: 5, kind: output, shape index: {}]
  %s6 = sld [smem:[#allocation0]]
  $region30: #{tpu_custom_call.1} parent=0
    _
  %s8 = ssub.s32 1, %s6
  %s9 = scalar_select 0, %s8, %s6
  $region1: #{tpu_custom_call.1} parent=0
    #allocation2 [shape = 'u8[4096]{0}', space=vmem, size = 0x1000, scoped, tag = 'output window, operand 0, single buffered']
    #allocation3 [shape = 's32[1]{0}', space=sflag, size = 0x4, scoped, tag = 'scoped memory for tpu_custom_call.1']
    %10 = vsyncpa [#allocation3], 0
    // Predicated region
    $region2: #{tpu_custom_call.1} parent=1 // pred_check
      _
    $region3: #{tpu_custom_call.1} parent=1 // pred_check_branch
      %12 = sbr.rel (0) target = $region5
    $region4: #{tpu_custom_call.1} parent=1 // pred_region
      _
    $region5: #{tpu_custom_call.1} parent=1 // pred_fallthru
      _
    // Predicated region
    $region6: #{tpu_custom_call.1} parent=1 // pred_check
      _
    $region7: #{tpu_custom_call.1} parent=1 // pred_check_branch
      %14 = sbr.rel (0) target = $region9
    $region8: #{tpu_custom_call.1} parent=1 // pred_region
      _
    $region9: #{tpu_custom_call.1} parent=1 // pred_fallthru
      _
    // Predicated region
    $region10: #{tpu_custom_call.1} parent=1 // pred_check
      _
    $region11: #{tpu_custom_call.1} parent=1 // pred_check_branch
      %16 = sbr.rel (0) target = $region13
    $region12: #{tpu_custom_call.1} parent=1 // pred_region
      _
    $region13: #{tpu_custom_call.1} parent=1 // pred_fallthru
      _
    // Predicated region
    $region14: #{tpu_custom_call.1} parent=1 // pred_check
      _
    $region15: #{tpu_custom_call.1} parent=1 // pred_check_branch
      %18 = sbr.rel (0) target = $region17
    $region16: #{tpu_custom_call.1} parent=1 // pred_region
      _
    $region17: #{tpu_custom_call.1} parent=1 // pred_fallthru
      _
    // Predicated region
    $region18: #{tpu_custom_call.1} parent=1 // pred_check
      _
    $region19: #{tpu_custom_call.1} parent=1 // pred_check_branch
      %20 = sbr.rel (0) target = $region21
    $region20: #{tpu_custom_call.1} parent=1 // pred_region
      _
    $region21: #{tpu_custom_call.1} parent=1 // pred_fallthru
      _
    %v21 = vld [vmem:[%s0] sm:$0xff]
    %v22 = vld [vmem:[%s0 + $0x8] sm:$0xff]
    %v23 = vld [vmem:[%s0 + $0x10] sm:$0xff]
    %v24 = vld [vmem:[%s0 + $0x18] sm:$0xff]
    %v25 = vld [vmem:[%s0 + $0x20] sm:$0xff]
    %v26 = vld [vmem:[%s0 + $0x28] sm:$0xff]
    %v27 = vld [vmem:[%s0 + $0x30] sm:$0xff]
    %v28 = vld [vmem:[%s0 + $0x38] sm:$0xff]
    %v29 = vld [vmem:[%s0 + $0x40] sm:$0xff]
    %v30 = vld [vmem:[%s0 + $0x48] sm:$0xff]
    %v31 = vld [vmem:[%s0 + $0x50] sm:$0xff]
    %v32 = vld [vmem:[%s0 + $0x58] sm:$0xff]
    %v33 = vld [vmem:[%s0 + $0x60] sm:$0xff]
    %v34 = vld [vmem:[%s0 + $0x68] sm:$0xff]
    %v35 = vld [vmem:[%s0 + $0x70] sm:$0xff]
    %v36 = vld [vmem:[%s0 + $0x78] sm:$0xff]
    %v37 = vld [vmem:[%s1] sm:$0xff]
    %v38 = vld [vmem:[%s1 + $0x8] sm:$0xff]
    %v39 = vld [vmem:[%s1 + $0x10] sm:$0xff]
    %v40 = vld [vmem:[%s1 + $0x18] sm:$0xff]
    %v41 = vld [vmem:[%s1 + $0x20] sm:$0xff]
    %v42 = vld [vmem:[%s1 + $0x28] sm:$0xff]
    %v43 = vld [vmem:[%s2] sm:$0x1]
    %v45 = vlaneseq
    %v46 = vshrl.u32 %v45, 7
    %v47 = vsub.s32 0, %v46
    %v48 = vrot.slane %v43, %v47
    %vm50 = vcmask 392192
    %v52 = vsel %vm50, %v21, 0
    %v55 = vsel %vm50, %v22, 0
    %v58 = vsel %vm50, %v23, 0
    %v61 = vsel %vm50, %v24, 0
    %v64 = vsel %vm50, %v25, 0
    %v67 = vsel %vm50, %v26, 0
    %v70 = vsel %vm50, %v27, 0
    %v73 = vsel %vm50, %v28, 0
    %v76 = vsel %vm50, %v29, 0
    %v79 = vsel %vm50, %v30, 0
    %v82 = vsel %vm50, %v31, 0
    %v85 = vsel %vm50, %v32, 0
    %v88 = vsel %vm50, %v33, 0
    %v91 = vsel %vm50, %v34, 0
    %v94 = vsel %vm50, %v35, 0
    %v97 = vsel %vm50, %v36, 0
    %99 = vmatprep.subr.mxu0 0.0
    %100 = vmatpush1.msra.mxu0 %v37
    %101 = vmatprep.subr.mxu0 0.0
    %102 = vmatpush1.msra.mxu0 %v38
    %103 = vmatprep.subr.mxu0 0.0
    %104 = vmatpush1.msra.mxu0 %v39
    %105 = vmatprep.subr.mxu0 0.0
    %106 = vmatpush1.msra.mxu0 %v40
    %107 = vmatprep.subr.mxu0 0.0
    %108 = vmatpush1.msra.mxu0 %v41
    %109 = vmatprep.subr.mxu0 0.0
    %110 = vmatpush1.msra.mxu0 %v42
    %111 = vmatprep.subr.mxu0 0.0
    %112 = vmatpush1.msra.mxu0 0.0
    %113 = vmatprep.subr.mxu0 0.0
    %114 = vmatpush1.msra.mxu0 0.0
    %115 = vmatprep.subr.mxu0 0.0
    %116 = vmatpush1.msra.mxu0 0.0
    %117 = vmatprep.subr.mxu0 0.0
    %118 = vmatpush1.msra.mxu0 0.0
    %119 = vmatprep.subr.mxu0 0.0
    %120 = vmatpush1.msra.mxu0 0.0
    %121 = vmatprep.subr.mxu0 0.0
    %122 = vmatpush1.msra.mxu0 0.0
    %123 = vmatprep.subr.mxu0 0.0
    %124 = vmatpush1.msra.mxu0 0.0
    %125 = vmatprep.subr.mxu0 0.0
    %126 = vmatpush1.msra.mxu0 0.0
    %127 = vmatprep.subr.mxu0 0.0
    %128 = vmatpush1.msra.mxu0 0.0
    %129 = vmatprep.subr.mxu0 0.0
    %130 = vmatpush1.msra.mxu0 0.0
    %131 = vmatprep.subr.mxu0 0.0
    %132 = vmatpush1.msra.mxu0 0.0
    %133 = vmatprep.subr.mxu0 0.0
    %134 = vmatpush1.msra.mxu0 0.0
    %135 = vmatprep.subr.mxu0 0.0
    %136 = vmatpush1.msra.mxu0 0.0
    %137 = vmatprep.subr.mxu0 0.0
    %138 = vmatpush1.msra.mxu0 0.0
    %139 = vmatprep.subr.mxu0 0.0
    %140 = vmatpush1.msra.mxu0 0.0
    %141 = vmatprep.subr.mxu0 0.0
    %142 = vmatpush1.msra.mxu0 0.0
    %143 = vmatprep.subr.mxu0 0.0
    %144 = vmatpush1.msra.mxu0 0.0
    %145 = vmatprep.subr.mxu0 0.0
    %146 = vmatpush1.msra.mxu0 0.0
    %147 = vmatprep.subr.mxu0 0.0
    %148 = vmatpush1.msra.mxu0 0.0
    %149 = vmatprep.subr.mxu0 0.0
    %150 = vmatpush1.msra.mxu0 0.0
    %151 = vmatprep.subr.mxu0 0.0
    %152 = vmatpush1.msra.mxu0 0.0
    %153 = vmatprep.subr.mxu0 0.0
    %154 = vmatpush1.msra.mxu0 0.0
    %155 = vmatprep.subr.mxu0 0.0
    %156 = vmatpush1.msra.mxu0 0.0
    %157 = vmatprep.subr.mxu0 0.0
    %158 = vmatpush1.msra.mxu0 0.0
    %159 = vmatprep.subr.mxu0 0.0
    %160 = vmatpush1.msra.mxu0 0.0
    %161 = vmatprep.subr.mxu0 0.0
    %162 = vmatpush1.msra.mxu0 0.0
    %163 = vmatprep.mubr.f32.mxu0 0.0
    %164 = vmatmul.mubr.f32.gmra.mrb[0].mxu0 %v52
    %v165 = vpop.f32.mrb[0].mxu0
    %v166 = vadd.f32 %v48, %v165
    %v167 = vpop.f32.mrb[0].mxu0
    %168 = vmatprep.mubr.f32.mxu0 0.0
    %169 = vmatmul.mubr.f32.gmra.mrb[0].mxu0 %v55
    %v170 = vpop.f32.mrb[0].mxu0
    %v171 = vadd.f32 %v48, %v170
    %v172 = vpop.f32.mrb[0].mxu0
    %173 = vmatprep.mubr.f32.mxu0 0.0
    %174 = vmatmul.mubr.f32.gmra.mrb[0].mxu0 %v58
    %v175 = vpop.f32.mrb[0].mxu0
    %v176 = vadd.f32 %v48, %v175
    %v177 = vpop.f32.mrb[0].mxu0
    %178 = vmatprep.mubr.f32.mxu0 0.0
    %179 = vmatmul.mubr.f32.gmra.mrb[0].mxu0 %v61
    %v180 = vpop.f32.mrb[0].mxu0
    %v181 = vadd.f32 %v48, %v180
    %v182 = vpop.f32.mrb[0].mxu0
    %183 = vmatprep.mubr.f32.mxu0 0.0
    %184 = vmatmul.mubr.f32.gmra.mrb[0].mxu0 %v64
    %v185 = vpop.f32.mrb[0].mxu0
    %v186 = vadd.f32 %v48, %v185
    %v187 = vpop.f32.mrb[0].mxu0
    %188 = vmatprep.mubr.f32.mxu0 0.0
    %189 = vmatmul.mubr.f32.gmra.mrb[0].mxu0 %v67
    %v190 = vpop.f32.mrb[0].mxu0
    %v191 = vadd.f32 %v48, %v190
    %v192 = vpop.f32.mrb[0].mxu0
    %193 = vmatprep.mubr.f32.mxu0 0.0
    %194 = vmatmul.mubr.f32.gmra.mrb[0].mxu0 %v70
    %v195 = vpop.f32.mrb[0].mxu0
    %v196 = vadd.f32 %v48, %v195
    %v197 = vpop.f32.mrb[0].mxu0
    %198 = vmatprep.mubr.f32.mxu0 0.0
    %199 = vmatmul.mubr.f32.gmra.mrb[0].mxu0 %v73
    %v200 = vpop.f32.mrb[0].mxu0
    %v201 = vadd.f32 %v48, %v200
    %v202 = vpop.f32.mrb[0].mxu0
    %203 = vmatprep.mubr.f32.mxu0 0.0
    %204 = vmatmul.mubr.f32.gmra.mrb[0].mxu0 %v76
    %v205 = vpop.f32.mrb[0].mxu0
    %v206 = vadd.f32 %v48, %v205
    %v207 = vpop.f32.mrb[0].mxu0
    %208 = vmatprep.mubr.f32.mxu0 0.0
    %209 = vmatmul.mubr.f32.gmra.mrb[0].mxu0 %v79
    %v210 = vpop.f32.mrb[0].mxu0
    %v211 = vadd.f32 %v48, %v210
    %v212 = vpop.f32.mrb[0].mxu0
    %213 = vmatprep.mubr.f32.mxu0 0.0
    %214 = vmatmul.mubr.f32.gmra.mrb[0].mxu0 %v82
    %v215 = vpop.f32.mrb[0].mxu0
    %v216 = vadd.f32 %v48, %v215
    %v217 = vpop.f32.mrb[0].mxu0
    %218 = vmatprep.mubr.f32.mxu0 0.0
    %219 = vmatmul.mubr.f32.gmra.mrb[0].mxu0 %v85
    %v220 = vpop.f32.mrb[0].mxu0
    %v221 = vadd.f32 %v48, %v220
    %v222 = vpop.f32.mrb[0].mxu0
    %223 = vmatprep.mubr.f32.mxu0 0.0
    %224 = vmatmul.mubr.f32.gmra.mrb[0].mxu0 %v88
    %v225 = vpop.f32.mrb[0].mxu0
    %v226 = vadd.f32 %v48, %v225
    %v227 = vpop.f32.mrb[0].mxu0
    %228 = vmatprep.mubr.f32.mxu0 0.0
    %229 = vmatmul.mubr.f32.gmra.mrb[0].mxu0 %v91
    %v230 = vpop.f32.mrb[0].mxu0
    %v231 = vadd.f32 %v48, %v230
    %v232 = vpop.f32.mrb[0].mxu0
    %233 = vmatprep.mubr.f32.mxu0 0.0
    %234 = vmatmul.mubr.f32.gmra.mrb[0].mxu0 %v94
    %v235 = vpop.f32.mrb[0].mxu0
    %v236 = vadd.f32 %v48, %v235
    %v237 = vpop.f32.mrb[0].mxu0
    %238 = vmatprep.mubr.f32.mxu0 0.0
    %239 = vmatmul.mubr.f32.gmra.mrb[0].mxu0 %v97
    %v240 = vpop.f32.mrb[0].mxu0
    %v241 = vadd.f32 %v48, %v240
    %v242 = vpop.f32.mrb[0].mxu0
    %243 = vdwg.mxu0
    %v244 = vmax.f32 %v166, 0.0
    %v245 = vmax.f32 %v171, 0.0
    %v246 = vmax.f32 %v176, 0.0
    %v247 = vmax.f32 %v181, 0.0
    %v248 = vmax.f32 %v186, 0.0
    %v249 = vmax.f32 %v191, 0.0
    %v250 = vmax.f32 %v196, 0.0
    %v251 = vmax.f32 %v201, 0.0
    %v252 = vmax.f32 %v206, 0.0
    %v253 = vmax.f32 %v211, 0.0
    %v254 = vmax.f32 %v216, 0.0
    %v255 = vmax.f32 %v221, 0.0
    %v256 = vmax.f32 %v226, 0.0
    %v257 = vmax.f32 %v231, 0.0
    %v258 = vmax.f32 %v236, 0.0
    %v259 = vmax.f32 %v241, 0.0
    %v260 = vld [vmem:[%s3] sm:$0xff]
    %v261 = vld [vmem:[%s3 + $0x8] sm:$0xff]
    %v262 = vld [vmem:[%s3 + $0x10] sm:$0xff]
    %v263 = vld [vmem:[%s3 + $0x18] sm:$0xff]
    %v264 = vld [vmem:[%s3 + $0x20] sm:$0xff]
    %v265 = vld [vmem:[%s3 + $0x28] sm:$0xff]
    %v266 = vld [vmem:[%s3 + $0x30] sm:$0xff]
    %v267 = vld [vmem:[%s3 + $0x38] sm:$0xff]
    %v268 = vld [vmem:[%s3 + $0x40] sm:$0xff]
    %v269 = vld [vmem:[%s3 + $0x48] sm:$0xff]
    %v270 = vld [vmem:[%s3 + $0x50] sm:$0xff]
    %v271 = vld [vmem:[%s3 + $0x58] sm:$0xff]
    %v272 = vld [vmem:[%s3 + $0x60] sm:$0xff]
    %v273 = vld [vmem:[%s3 + $0x68] sm:$0xff]
    %v274 = vld [vmem:[%s3 + $0x70] sm:$0xff]
    %v275 = vld [vmem:[%s3 + $0x78] sm:$0xff]
    %v276 = vld [vmem:[%s4] sm:$0x1]
    %v278 = vlaneseq
    %v279 = vshrl.u32 %v278, 7
    %v280 = vsub.s32 0, %v279
    %v281 = vrot.slane %v276, %v280
    %283 = vmatprep.subr.mxu0 0.0
    %284 = vmatpush1.msra.mxu0 %v260
    %285 = vmatprep.subr.mxu0 0.0
    %286 = vmatpush1.msra.mxu0 %v261
    %287 = vmatprep.subr.mxu0 0.0
    %288 = vmatpush1.msra.mxu0 %v262
    %289 = vmatprep.subr.mxu0 0.0
    %290 = vmatpush1.msra.mxu0 %v263
    %291 = vmatprep.subr.mxu0 0.0
    %292 = vmatpush1.msra.mxu0 %v264
    %293 = vmatprep.subr.mxu0 0.0
    %294 = vmatpush1.msra.mxu0 %v265
    %295 = vmatprep.subr.mxu0 0.0
    %296 = vmatpush1.msra.mxu0 %v266
    %297 = vmatprep.subr.mxu0 0.0
    %298 = vmatpush1.msra.mxu0 %v267
    %299 = vmatprep.subr.mxu0 0.0
    %300 = vmatpush1.msra.mxu0 %v268
    %301 = vmatprep.subr.mxu0 0.0
    %302 = vmatpush1.msra.mxu0 %v269
    %303 = vmatprep.subr.mxu0 0.0
    %304 = vmatpush1.msra.mxu0 %v270
    %305 = vmatprep.subr.mxu0 0.0
    %306 = vmatpush1.msra.mxu0 %v271
    %307 = vmatprep.subr.mxu0 0.0
    %308 = vmatpush1.msra.mxu0 %v272
    %309 = vmatprep.subr.mxu0 0.0
    %310 = vmatpush1.msra.mxu0 %v273
    %311 = vmatprep.subr.mxu0 0.0
    %312 = vmatpush1.msra.mxu0 %v274
    %313 = vmatprep.subr.mxu0 0.0
    %314 = vmatpush1.msra.mxu0 %v275
    %315 = vmatprep.subr.mxu0 0.0
    %316 = vmatpush1.msra.mxu0 0.0
    %317 = vmatprep.subr.mxu0 0.0
    %318 = vmatpush1.msra.mxu0 0.0
    %319 = vmatprep.subr.mxu0 0.0
    %320 = vmatpush1.msra.mxu0 0.0
    %321 = vmatprep.subr.mxu0 0.0
    %322 = vmatpush1.msra.mxu0 0.0
    %323 = vmatprep.subr.mxu0 0.0
    %324 = vmatpush1.msra.mxu0 0.0
    %325 = vmatprep.subr.mxu0 0.0
    %326 = vmatpush1.msra.mxu0 0.0
    %327 = vmatprep.subr.mxu0 0.0
    %328 = vmatpush1.msra.mxu0 0.0
    %329 = vmatprep.subr.mxu0 0.0
    %330 = vmatpush1.msra.mxu0 0.0
    %331 = vmatprep.subr.mxu0 0.0
    %332 = vmatpush1.msra.mxu0 0.0
    %333 = vmatprep.subr.mxu0 0.0
    %334 = vmatpush1.msra.mxu0 0.0
    %335 = vmatprep.subr.mxu0 0.0
    %336 = vmatpush1.msra.mxu0 0.0
    %337 = vmatprep.subr.mxu0 0.0
    %338 = vmatpush1.msra.mxu0 0.0
    %339 = vmatprep.subr.mxu0 0.0
    %340 = vmatpush1.msra.mxu0 0.0
    %341 = vmatprep.subr.mxu0 0.0
    %342 = vmatpush1.msra.mxu0 0.0
    %343 = vmatprep.subr.mxu0 0.0
    %344 = vmatpush1.msra.mxu0 0.0
    %345 = vmatprep.subr.mxu0 0.0
    %346 = vmatpush1.msra.mxu0 0.0
    %347 = vmatprep.mubr.f32.mxu0 0.0
    %348 = vmatmul.mubr.f32.gmra.mrb[0].mxu0 %v244
    %v349 = vpop.f32.mrb[0].mxu0
    %v350 = vadd.f32 %v281, %v349
    %v351 = vpop.f32.mrb[0].mxu0
    %352 = vmatprep.mubr.f32.mxu0 0.0
    %353 = vmatmul.mubr.f32.gmra.mrb[0].mxu0 %v245
    %v354 = vpop.f32.mrb[0].mxu0
    %v355 = vadd.f32 %v281, %v354
    %v356 = vpop.f32.mrb[0].mxu0
    %357 = vmatprep.mubr.f32.mxu0 0.0
    %358 = vmatmul.mubr.f32.gmra.mrb[0].mxu0 %v246
    %v359 = vpop.f32.mrb[0].mxu0
    %v360 = vadd.f32 %v281, %v359
    %v361 = vpop.f32.mrb[0].mxu0
    %362 = vmatprep.mubr.f32.mxu0 0.0
    %363 = vmatmul.mubr.f32.gmra.mrb[0].mxu0 %v247
    %v364 = vpop.f32.mrb[0].mxu0
    %v365 = vadd.f32 %v281, %v364
    %v366 = vpop.f32.mrb[0].mxu0
    %367 = vmatprep.mubr.f32.mxu0 0.0
    %368 = vmatmul.mubr.f32.gmra.mrb[0].mxu0 %v248
    %v369 = vpop.f32.mrb[0].mxu0
    %v370 = vadd.f32 %v281, %v369
    %v371 = vpop.f32.mrb[0].mxu0
    %372 = vmatprep.mubr.f32.mxu0 0.0
    %373 = vmatmul.mubr.f32.gmra.mrb[0].mxu0 %v249
    %v374 = vpop.f32.mrb[0].mxu0
    %v375 = vadd.f32 %v281, %v374
    %v376 = vpop.f32.mrb[0].mxu0
    %377 = vmatprep.mubr.f32.mxu0 0.0
    %378 = vmatmul.mubr.f32.gmra.mrb[0].mxu0 %v250
    %v379 = vpop.f32.mrb[0].mxu0
    %v380 = vadd.f32 %v281, %v379
    %v381 = vpop.f32.mrb[0].mxu0
    %382 = vmatprep.mubr.f32.mxu0 0.0
    %383 = vmatmul.mubr.f32.gmra.mrb[0].mxu0 %v251
    %v384 = vpop.f32.mrb[0].mxu0
    %v385 = vadd.f32 %v281, %v384
    %v386 = vpop.f32.mrb[0].mxu0
    %387 = vmatprep.mubr.f32.mxu0 0.0
    %388 = vmatmul.mubr.f32.gmra.mrb[0].mxu0 %v252
    %v389 = vpop.f32.mrb[0].mxu0
    %v390 = vadd.f32 %v281, %v389
    %v391 = vpop.f32.mrb[0].mxu0
    %392 = vmatprep.mubr.f32.mxu0 0.0
    %393 = vmatmul.mubr.f32.gmra.mrb[0].mxu0 %v253
    %v394 = vpop.f32.mrb[0].mxu0
    %v395 = vadd.f32 %v281, %v394
    %v396 = vpop.f32.mrb[0].mxu0
    %397 = vmatprep.mubr.f32.mxu0 0.0
    %398 = vmatmul.mubr.f32.gmra.mrb[0].mxu0 %v254
    %v399 = vpop.f32.mrb[0].mxu0
    %v400 = vadd.f32 %v281, %v399
    %v401 = vpop.f32.mrb[0].mxu0
    %402 = vmatprep.mubr.f32.mxu0 0.0
    %403 = vmatmul.mubr.f32.gmra.mrb[0].mxu0 %v255
    %v404 = vpop.f32.mrb[0].mxu0
    %v405 = vadd.f32 %v281, %v404
    %v406 = vpop.f32.mrb[0].mxu0
    %407 = vmatprep.mubr.f32.mxu0 0.0
    %408 = vmatmul.mubr.f32.gmra.mrb[0].mxu0 %v256
    %v409 = vpop.f32.mrb[0].mxu0
    %v410 = vadd.f32 %v281, %v409
    %v411 = vpop.f32.mrb[0].mxu0
    %412 = vmatprep.mubr.f32.mxu0 0.0
    %413 = vmatmul.mubr.f32.gmra.mrb[0].mxu0 %v257
    %v414 = vpop.f32.mrb[0].mxu0
    %v415 = vadd.f32 %v281, %v414
    %v416 = vpop.f32.mrb[0].mxu0
    %417 = vmatprep.mubr.f32.mxu0 0.0
    %418 = vmatmul.mubr.f32.gmra.mrb[0].mxu0 %v258
    %v419 = vpop.f32.mrb[0].mxu0
    %v420 = vadd.f32 %v281, %v419
    %v421 = vpop.f32.mrb[0].mxu0
    %422 = vmatprep.mubr.f32.mxu0 0.0
    %423 = vmatmul.mubr.f32.gmra.mrb[0].mxu0 %v259
    %v424 = vpop.f32.mrb[0].mxu0
    %v425 = vadd.f32 %v281, %v424
    %v426 = vpop.f32.mrb[0].mxu0
    %427 = vdwg.mxu0
    %428 = vxpose.xlu0.b32.start [1/16] %v350, 128
    %429 = vxpose.xlu0.b32.cont [2/16] %v355, 128
    %430 = vxpose.xlu0.b32.cont [3/16] %v360, 128
    %431 = vxpose.xlu0.b32.cont [4/16] %v365, 128
    %432 = vxpose.xlu0.b32.cont [5/16] %v370, 128
    %433 = vxpose.xlu0.b32.cont [6/16] %v375, 128
    %434 = vxpose.xlu0.b32.cont [7/16] %v380, 128
    %435 = vxpose.xlu0.b32.cont [8/16] %v385, 128
    %436 = vxpose.xlu0.b32.cont [9/16] %v390, 128
    %437 = vxpose.xlu0.b32.cont [10/16] %v395, 128
    %438 = vxpose.xlu0.b32.cont [11/16] %v400, 128
    %439 = vxpose.xlu0.b32.cont [12/16] %v405, 128
    %440 = vxpose.xlu0.b32.cont [13/16] %v410, 128
    %441 = vxpose.xlu0.b32.cont [14/16] %v415, 128
    %442 = vxpose.xlu0.b32.cont [15/16] %v420, 128
    %443 = vxpose.xlu0.b32.end [16/16] %v425, 128
    %v444 = vpop.trf.xlu0
    %v445 = vpop.trf.xlu0
    %v446 = vpop.trf.xlu0
    %v447 = vpop.trf.xlu0
    %v448 = vpop.trf.xlu0
    %v449 = vpop.trf.xlu0
    %v450 = vpop.trf.xlu0
    %v451 = vpop.trf.xlu0
    %v452 = vpop.trf.xlu0
    %v453 = vpop.trf.xlu0
    %v454 = vpop.trf.xlu0
    %v455 = vpop.trf.xlu0
    %v456 = vpop.trf.xlu0
    %v457 = vpop.trf.xlu0
    %v458 = vpop.trf.xlu0
    %v459 = vpop.trf.xlu0
    %460 = vst [vmem:[#allocation2] sm:$0xff] %v444
    // Predicated region
    $region22: #{tpu_custom_call.1} parent=1 // pred_check
      _
    $region23: #{tpu_custom_call.1} parent=1 // pred_check_branch
      %462 = sbr.rel (0) target = $region25
    $region24: #{tpu_custom_call.1} parent=1 // pred_region
      %s464 = ssub.s32 128, 128
      %465 = vsyncadd [#allocation3], %s464
      %s467 = sshll.u32 [#allocation2], 4
      %s468 = int_to_ptr.vmem [resolvable:$true] %s467
      %470 = dma.vmem_to_hbm [thread:$0]  %s468, 128, %s5, [#allocation3]
    $region25: #{tpu_custom_call.1} parent=1 // pred_fallthru
      _
    // Predicated region
    $region26: #{tpu_custom_call.1} parent=1 // pred_check
      _
    $region27: #{tpu_custom_call.1} parent=1 // pred_check_branch
      %472 = sbr.rel (0) target = $region29
    $region28: #{tpu_custom_call.1} parent=1 // pred_region
      %473 = dma.done [#allocation3], 128
    $region29: #{tpu_custom_call.1} parent=1 // pred_fallthru
      _
    %474 = vsyncpa [#allocation3], 1

</llo_original>
